<compile_context>
chip_gen: v7x
topology: tpu7x:2x2x1
jax: 0.10.0
libtpu: 0.0.40
codegen_flags: <defaults>
</compile_context>

<pallas_src>
import jax
import jax.numpy as jnp
from jax.experimental import pallas as pl
from jax.experimental.pallas import tpu as pltpu

LANE = 128
SUBLANE = 8


def _round_up(n, m):
    return ((n + m - 1) // m) * m


def _pad_to(a, shape):
    pads = [(0, s - d) for d, s in zip(a.shape, shape)]
    if all(p == (0, 0) for p in pads):
        return a
    return jnp.pad(a, pads)


def _vmem_limit_bytes():
    """Per-generation VMEM budget with ~25% headroom for pipeline buffers and
    compiler-internal scratch (v5e/v6e: 128 MiB -> 96 MiB, v7x: 64 MiB -> 48 MiB)."""
    cap = 64 * 1024 * 1024
    try:
        cap = int(pltpu.get_tpu_info().vmem_capacity_bytes)
    except Exception:
        pass
    return (cap * 3) // 4


def _block_spec(shape, index_map, *, single_buffer=False):
    """BlockSpec helper: grid-invariant operands get a single pipeline buffer so
    the resident weights are not double-buffered in VMEM."""
    if single_buffer:
        try:
            return pl.BlockSpec(shape, index_map, pipeline_mode=pl.Buffered(1))
        except (AttributeError, TypeError):
            pass  # older jax without pipeline_mode/Buffered: default buffering
    return pl.BlockSpec(shape, index_map)


def mlp_kernel(x_ref, w1_ref, b1_ref, w2_ref, b2_ref, o_ref, h_ref):
    # Grid = (batch tile i, fc2 output-column tile j); j is the innermost axis.
    # fc1 runs once per batch tile (j == 0): bias folded into the f32 MXU
    # accumulator, ReLU in f32, then one cast to bf16 into the VMEM scratch so
    # the second GEMM is also a bf16 MXU matmul with f32 accumulation.
    @pl.when(pl.program_id(1) == 0)
    def _():
        h = b1_ref[...] + jnp.dot(
            x_ref[...], w1_ref[...], preferred_element_type=jnp.float32
        )
        h_ref[...] = jnp.maximum(h, 0.0).astype(h_ref.dtype)

    # fc2 for this output-column tile.
    y = b2_ref[...] + jnp.dot(
        h_ref[...], w2_ref[...], preferred_element_type=jnp.float32
    )
    o_ref[...] = y.astype(o_ref.dtype)


def prepare_params(w1_t, b1, w2_t, b2, compute_dtype=jnp.bfloat16):
    """Pad weights/biases to lane-aligned shapes and cast weights to the MXU
    compute dtype ONCE at init (not per forward call). Zero padding is exact:
    padded hidden columns stay 0 through bias+ReLU and contribute nothing to fc2."""
    in_dim, hidden = w1_t.shape
    in_p = _round_up(in_dim, LANE)
    hid_p = _round_up(hidden, LANE)
    w1_p = _pad_to(w1_t, (in_p, hid_p)).astype(compute_dtype)
    w2_p = _pad_to(w2_t, (hid_p, hid_p)).astype(compute_dtype)
    b1_p = _pad_to(b1, (1, hid_p)).astype(jnp.float32)
    b2_p = _pad_to(b2, (1, hid_p)).astype(jnp.float32)
    return (w1_p, b1_p, w2_p, b2_p), (in_dim, hidden)


def embedding_forward(x, params, dims, *, batch_tile=256, n_tile=None):
    """x: (B, input_dim) f32; params from prepare_params. Returns (B, hidden)."""
    w1_p, b1_p, w2_p, b2_p = params
    in_dim, hidden = dims
    B = x.shape[0]
    in_p, hid_p = w1_p.shape
    compute_dtype = w1_p.dtype
    itemsize = jnp.dtype(compute_dtype).itemsize

    vmem_limit = _vmem_limit_bytes()

    # Batch tile: big enough to amortize per-step overhead / feed the MXU,
    # sublane-aligned, capped by the (sublane-rounded) batch.
    tb = min(_round_up(batch_tile, SUBLANE), _round_up(B, SUBLANE))
    grid_b = pl.cdiv(B, tb)

    # fc2 output-column tile: keep w2 fully resident when it fits the budget,
    # otherwise N-tile it (important for large hidden on v7x's 64 MiB VMEM).
    if n_tile is None:
        w2_budget = vmem_limit // 3
        if hid_p * hid_p * itemsize <= w2_budget:
            tn = hid_p
        else:
            tn = max(LANE, (w2_budget // (hid_p * itemsize)) // LANE * LANE)
            tn = min(tn, hid_p)
    else:
        tn = min(_round_up(n_tile, LANE), hid_p)
    grid_n = pl.cdiv(hid_p, tn)
    w2_resident = grid_n == 1  # single-buffer w2/b2 only when grid-invariant

    # x: zero-pad the contraction (lane) dim (exact) and cast to bf16 (halves
    # the streamed DMA bytes). Batch dim is NOT padded: partial edge blocks are
    # masked on store and rows are independent.
    x_p = _pad_to(x, (B, in_p)).astype(compute_dtype)

    out_p = pl.pallas_call(
        mlp_kernel,
        out_shape=jax.ShapeDtypeStruct((B, hid_p), x.dtype),
        grid_spec=pltpu.PrefetchScalarGridSpec(
            num_scalar_prefetch=0,
            grid=(grid_b, grid_n),
            in_specs=[
                # x: streamed per batch tile (default double-buffering).
                pl.BlockSpec((tb, in_p), lambda i, j: (i, 0)),
                # fc1 weights/bias: resident -> single pipeline buffer.
                _block_spec((in_p, hid_p), lambda i, j: (0, 0), single_buffer=True),
                _block_spec((1, hid_p), lambda i, j: (0, 0), single_buffer=True),
                # fc2 weights/bias: resident when grid_n == 1, else streamed per j.
                _block_spec((hid_p, tn), lambda i, j: (0, j), single_buffer=w2_resident),
                _block_spec((1, tn), lambda i, j: (0, j), single_buffer=w2_resident),
            ],
            out_specs=pl.BlockSpec((tb, tn), lambda i, j: (i, j)),
            # fc1 activation lives across the j axis in VMEM (bf16).
            scratch_shapes=[pltpu.VMEM((tb, hid_p), compute_dtype)],
        ),
        compiler_params=pltpu.CompilerParams(
            dimension_semantics=("parallel", "arbitrary"),
            vmem_limit_bytes=vmem_limit,
        ),
    )(x_p, w1_p, b1_p, w2_p, b2_p)

    if hidden != hid_p:
        out_p = out_p[:, :hidden]
    return out_p


def init_linear_params(key, in_features, out_features, dtype=jnp.float32):
    """Mimic PyTorch nn.Linear default init: U(-1/sqrt(fan_in), 1/sqrt(fan_in))."""
    kw, kb = jax.random.split(key)
    bound = 1.0 / jnp.sqrt(jnp.array(in_features, dtype))
    # PyTorch stores weight as (out, in); we keep it transposed (in, out) for x @ W.
    w_t = jax.random.uniform(kw, (in_features, out_features), dtype, -bound, bound)
    b = jax.random.uniform(kb, (1, out_features), dtype, -bound, bound)
    return w_t, b


if __name__ == "__main__":
    input_dim = 16
    hidden_dim = 32
    batch = 8

    key = jax.random.PRNGKey(0)
    k_x, k_fc1, k_fc2 = jax.random.split(key, 3)

    x = jax.random.normal(k_x, (batch, input_dim), dtype=jnp.float32)
    w1_t, b1 = init_linear_params(k_fc1, input_dim, hidden_dim)
    w2_t, b2 = init_linear_params(k_fc2, hidden_dim, hidden_dim)

    params, dims = prepare_params(w1_t, b1, w2_t, b2)
    out = embedding_forward(x, params, dims)
    jax.block_until_ready(out)

    # Reference in plain JAX (same math as the PyTorch module), f32.
    ref = jnp.maximum(x @ w1_t + b1, 0.0) @ w2_t + b2
    assert out.shape == (batch, hidden_dim)
    # bf16 MXU operands (f32 accumulation) -> small relative rounding vs f32 ref.
    assert jnp.allclose(out, ref, atol=2e-2, rtol=2e-2), float(
        jnp.max(jnp.abs(out - ref))
    )

    print("KERNEL_OK")
</pallas_src>

<mosaic_0001>
module attributes {stable_mosaic.version = 11 : i64} {
  func.func @mlp_kernel(%arg0: i32, %arg1: i32, %arg2: memref<8x128xbf16, #tpu.memory_space<vmem>>, %arg3: memref<128x128xbf16, #tpu.memory_space<vmem>>, %arg4: memref<1x128xf32, #tpu.memory_space<vmem>>, %arg5: memref<128x128xbf16, #tpu.memory_space<vmem>>, %arg6: memref<1x128xf32, #tpu.memory_space<vmem>>, %arg7: memref<8x128xf32, #tpu.memory_space<vmem>>, %arg8: memref<8x128xbf16, #tpu.memory_space<vmem>>) attributes {dimension_semantics = [#tpu.dimension_semantics<parallel>, #tpu.dimension_semantics<arbitrary>], iteration_bounds = array<i64: 1, 1>, scalar_prefetch = 0 : i64, scratch_operands = 1 : i64, tpu.core_type = #tpu.core_type<tc>, window_params = [{transform_indices = @transform_0, window_bounds = array<i64: 8, 128>}, {pipeline_mode = #tpu.pipeline_mode<synchronous>, transform_indices = @transform_1, window_bounds = array<i64: 128, 128>}, {pipeline_mode = #tpu.pipeline_mode<synchronous>, transform_indices = @transform_2, window_bounds = array<i64: 1, 128>}, {pipeline_mode = #tpu.pipeline_mode<synchronous>, transform_indices = @transform_3, window_bounds = array<i64: 128, 128>}, {pipeline_mode = #tpu.pipeline_mode<synchronous>, transform_indices = @transform_4, window_bounds = array<i64: 1, 128>}, {transform_indices = @transform_5, window_bounds = array<i64: 8, 128>}]} {
    %c0_i32 = arith.constant 0 : i32
    %0 = arith.cmpi eq, %arg1, %c0_i32 : i32
    %1 = arith.extui %0 : i1 to i32
    %c0_i32_0 = arith.constant 0 : i32
    %2 = arith.cmpi ne, %1, %c0_i32_0 : i32
    scf.if %2 {
      %c0_8 = arith.constant 0 : index
      %c0_9 = arith.constant 0 : index
      %10 = vector.load %arg4[%c0_8, %c0_9] : memref<1x128xf32, #tpu.memory_space<vmem>>, vector<1x128xf32>
      %c0_10 = arith.constant 0 : index
      %c0_11 = arith.constant 0 : index
      %11 = vector.load %arg2[%c0_10, %c0_11] : memref<8x128xbf16, #tpu.memory_space<vmem>>, vector<8x128xbf16>
      %c0_12 = arith.constant 0 : index
      %c0_13 = arith.constant 0 : index
      %12 = vector.load %arg3[%c0_12, %c0_13] : memref<128x128xbf16, #tpu.memory_space<vmem>>, vector<128x128xbf16>
      %cst_14 = arith.constant dense<0.000000e+00> : vector<8x128xf32>
      %13 = tpu.matmul %11, %12, %cst_14 {dimension_numbers = #tpu.dot_dimension_numbers<[1], [0], [0], [1], [0, 0, 1, 1], [], []>} : vector<8x128xbf16>, vector<128x128xbf16>, vector<8x128xf32> -> vector<8x128xf32>
      %14 = vector.broadcast %10 : vector<1x128xf32> to vector<8x128xf32>
      %15 = arith.addf %14, %13 : vector<8x128xf32>
      %cst_15 = arith.constant 0.000000e+00 : f32
      %16 = vector.broadcast %cst_15 : f32 to vector<8x128xf32>
      %17 = arith.maximumf %15, %16 : vector<8x128xf32>
      %18 = arith.truncf %17 : vector<8x128xf32> to vector<8x128xbf16>
      %c0_16 = arith.constant 0 : index
      %c0_17 = arith.constant 0 : index
      %19 = vector.load %arg8[%c0_16, %c0_17] : memref<8x128xbf16, #tpu.memory_space<vmem>>, vector<8x128xbf16>
      tpu.vector_store %arg8[%c0_16, %c0_17], %18 {strides = array<i32>} : memref<8x128xbf16, #tpu.memory_space<vmem>>, vector<8x128xbf16>,
    } else {
    }
    %c0 = arith.constant 0 : index
    %c0_1 = arith.constant 0 : index
    %3 = vector.load %arg6[%c0, %c0_1] : memref<1x128xf32, #tpu.memory_space<vmem>>, vector<1x128xf32>
    %c0_2 = arith.constant 0 : index
    %c0_3 = arith.constant 0 : index
    %4 = vector.load %arg8[%c0_2, %c0_3] : memref<8x128xbf16, #tpu.memory_space<vmem>>, vector<8x128xbf16>
    %c0_4 = arith.constant 0 : index
    %c0_5 = arith.constant 0 : index
    %5 = vector.load %arg5[%c0_4, %c0_5] : memref<128x128xbf16, #tpu.memory_space<vmem>>, vector<128x128xbf16>
    %cst = arith.constant dense<0.000000e+00> : vector<8x128xf32>
    %6 = tpu.matmul %4, %5, %cst {dimension_numbers = #tpu.dot_dimension_numbers<[1], [0], [0], [1], [0, 0, 1, 1], [], []>} : vector<8x128xbf16>, vector<128x128xbf16>, vector<8x128xf32> -> vector<8x128xf32>
    %7 = vector.broadcast %3 : vector<1x128xf32> to vector<8x128xf32>
    %8 = arith.addf %7, %6 : vector<8x128xf32>
    %c0_6 = arith.constant 0 : index
    %c0_7 = arith.constant 0 : index
    %9 = vector.load %arg7[%c0_6, %c0_7] : memref<8x128xf32, #tpu.memory_space<vmem>>, vector<8x128xf32>
    tpu.vector_store %arg7[%c0_6, %c0_7], %8 {strides = array<i32>} : memref<8x128xf32, #tpu.memory_space<vmem>>, vector<8x128xf32>,
    return
  }
  func.func @transform_0(%arg0: i32, %arg1: i32) -> (i32, i32) {
    %c0_i32 = arith.constant 0 : i32
    %c0_i32_0 = arith.constant 0 : i32
    return %arg0, %c0_i32 : i32, i32
  }
  func.func @transform_1(%arg0: i32, %arg1: i32) -> (i32, i32) {
    %c0_i32 = arith.constant 0 : i32
    %c0_i32_0 = arith.constant 0 : i32
    %c0_i32_1 = arith.constant 0 : i32
    return %c0_i32, %c0_i32_0 : i32, i32
  }
  func.func @transform_2(%arg0: i32, %arg1: i32) -> (i32, i32) {
    %c0_i32 = arith.constant 0 : i32
    %c0_i32_0 = arith.constant 0 : i32
    %c0_i32_1 = arith.constant 0 : i32
    return %c0_i32, %c0_i32_0 : i32, i32
  }
  func.func @transform_3(%arg0: i32, %arg1: i32) -> (i32, i32) {
    %c0_i32 = arith.constant 0 : i32
    %c0_i32_0 = arith.constant 0 : i32
    return %c0_i32, %arg1 : i32, i32
  }
  func.func @transform_4(%arg0: i32, %arg1: i32) -> (i32, i32) {
    %c0_i32 = arith.constant 0 : i32
    %c0_i32_0 = arith.constant 0 : i32
    return %c0_i32, %arg1 : i32, i32
  }
  func.func @transform_5(%arg0: i32, %arg1: i32) -> (i32, i32) {
    %c0_i32 = arith.constant 0 : i32
    return %arg0, %arg1 : i32, i32
  }
}

</mosaic_0001>

<llo_original>
// kernel: tpu_custom_call.1
$region0: #{tpu_custom_call.1}
  #allocation0 [shape = 'u32[]', space=smem, size = 0x4, offset = 0x4, fixed_abs, tag = 'smem constant byte address 0x4 - core index']
  #allocation1 [shape = 'u32[144,128]{1,0:T(1,128)}', space=vmem, size = 0x12000, scoped, tag = 'internal scratch']
  #allocation2 [shape = 'bf16[8,128]{1,0:T(8,128)(2,1)}', space=vmem, size = 0x800, scoped, tag = 'scratch operand']
  %s0 = inlined_call_operand.hbm [shape: bf16[8,128], index: 0, kind: input, shape index: {}]
  %s1 = inlined_call_operand.hbm [shape: bf16[128,128], index: 1, kind: input, shape index: {}]
  %s2 = inlined_call_operand.vmem [shape: f32[1,128], index: 2, kind: input, shape index: {}]
  %s3 = inlined_call_operand.hbm [shape: bf16[128,128], index: 3, kind: input, shape index: {}]
  %s4 = inlined_call_operand.vmem [shape: f32[1,128], index: 4, kind: input, shape index: {}]
  %s5 = inlined_call_operand.hbm [shape: f32[8,128], index: 5, kind: output, shape index: {}]
  %s6 = sld [smem:[#allocation0]]
  $region46: #{tpu_custom_call.1} parent=0
    _
  %s8 = ssub.s32 1, %s6
  %s9 = scalar_select 0, %s8, %s6
  $region1: #{tpu_custom_call.1} parent=0
    #allocation3 [shape = 'u8[2048]{0}', space=vmem, size = 0x800, scoped, tag = 'input window, operand 0, single buffered']
    #allocation4 [shape = 's32[1]{0}', space=sflag, size = 0x4, scoped, tag = 'scoped memory for tpu_custom_call.1']
    #allocation5 [shape = 's32[1]{0}', space=sflag, size = 0x4, scoped, tag = 'scoped memory for tpu_custom_call.1']
    #allocation6 [shape = 'u8[32768]{0}', space=vmem, size = 0x8000, scoped, tag = 'input window, operand 1, single buffered']
    #allocation7 [shape = 's32[1]{0}', space=sflag, size = 0x4, scoped, tag = 'scoped memory for tpu_custom_call.1']
    #allocation8 [shape = 'u8[32768]{0}', space=vmem, size = 0x8000, scoped, tag = 'input window, operand 3, single buffered']
    #allocation9 [shape = 'u8[4096]{0}', space=vmem, size = 0x1000, scoped, tag = 'output window, operand 0, single buffered']
    %10 = vsyncpa [#allocation4], 0
    %11 = vsyncpa [#allocation7], 0
    %12 = vsyncpa [#allocation5], 0
    // Predicated region
    $region2: #{tpu_custom_call.1} parent=1 // pred_check
      _
    $region3: #{tpu_custom_call.1} parent=1 // pred_check_branch
      %14 = sbr.rel (0) target = $region5
    $region4: #{tpu_custom_call.1} parent=1 // pred_region
      %s16 = ssub.s32 64, 64
      %17 = vsyncadd [#allocation4], %s16
      %s19 = sshll.u32 [#allocation3], 4
      %s20 = int_to_ptr.vmem [resolvable:$true] %s19
      %22 = dma.hbm_to_vmem [thread:$0]  %s0, 64, %s20, [#allocation4]
    $region5: #{tpu_custom_call.1} parent=1 // pred_fallthru
      _
    // Predicated region
    $region6: #{tpu_custom_call.1} parent=1 // pred_check
      _
    $region7: #{tpu_custom_call.1} parent=1 // pred_check_branch
      %24 = sbr.rel (0) target = $region9
    $region8: #{tpu_custom_call.1} parent=1 // pred_region
      %s26 = ssub.s32 1024, 1024
      %27 = vsyncadd [#allocation7], %s26
      %s28 = sshll.u32 [#allocation6], 4
      %s29 = int_to_ptr.vmem [resolvable:$true] %s28
      %34 = dma.hbm_to_vmem [thread:$0]  %s1, 1024, %s29, [#allocation7], 64, 64, 4
    $region9: #{tpu_custom_call.1} parent=1 // pred_fallthru
      _
    // Predicated region
    $region10: #{tpu_custom_call.1} parent=1 // pred_check
      _
    $region11: #{tpu_custom_call.1} parent=1 // pred_check_branch
      %36 = sbr.rel (0) target = $region13
    $region12: #{tpu_custom_call.1} parent=1 // pred_region
      _
    $region13: #{tpu_custom_call.1} parent=1 // pred_fallthru
      _
    // Predicated region
    $region14: #{tpu_custom_call.1} parent=1 // pred_check
      _
    $region15: #{tpu_custom_call.1} parent=1 // pred_check_branch
      %38 = sbr.rel (0) target = $region17
    $region16: #{tpu_custom_call.1} parent=1 // pred_region
      %s40 = ssub.s32 1024, 1024
      %41 = vsyncadd [#allocation7], %s40
      %s42 = sshll.u32 [#allocation8], 4
      %s43 = int_to_ptr.vmem [resolvable:$true] %s42
      %48 = dma.hbm_to_vmem [thread:$0]  %s3, 1024, %s43, [#allocation7], 64, 64, 4
    $region17: #{tpu_custom_call.1} parent=1 // pred_fallthru
      _
    // Predicated region
    $region18: #{tpu_custom_call.1} parent=1 // pred_check
      _
    $region19: #{tpu_custom_call.1} parent=1 // pred_check_branch
      %50 = sbr.rel (0) target = $region21
    $region20: #{tpu_custom_call.1} parent=1 // pred_region
      _
    $region21: #{tpu_custom_call.1} parent=1 // pred_fallthru
      _
    // Predicated region
    $region22: #{tpu_custom_call.1} parent=1 // pred_check
      _
    $region23: #{tpu_custom_call.1} parent=1 // pred_check_branch
      %52 = sbr.rel (0) target = $region25
    $region24: #{tpu_custom_call.1} parent=1 // pred_region
      %53 = dma.done [#allocation4], 64
    $region25: #{tpu_custom_call.1} parent=1 // pred_fallthru
      _
    // Predicated region
    $region26: #{tpu_custom_call.1} parent=1 // pred_check
      _
    $region27: #{tpu_custom_call.1} parent=1 // pred_check_branch
      %55 = sbr.rel (0) target = $region29
    $region28: #{tpu_custom_call.1} parent=1 // pred_region
      %56 = dma.done [#allocation7], 1024
    $region29: #{tpu_custom_call.1} parent=1 // pred_fallthru
      _
    // Predicated region
    $region30: #{tpu_custom_call.1} parent=1 // pred_check
      _
    $region31: #{tpu_custom_call.1} parent=1 // pred_check_branch
      %58 = sbr.rel (0) target = $region33
    $region32: #{tpu_custom_call.1} parent=1 // pred_region
      %59 = dma.done [#allocation7], 1024
    $region33: #{tpu_custom_call.1} parent=1 // pred_fallthru
      _
    %p61 = scmp.eq.s32.totalorder 0, 0
    // Predicated region
    $region34: #{tpu_custom_call.1} parent=1 // pred_check
      %p62 = pneg %p61
    $region35: #{tpu_custom_call.1} parent=1 // pred_check_branch
      %64 = sbr.rel (%p62) target = $region37
    $region36: #{tpu_custom_call.1} parent=1 // pred_region
      %v65 = vld [vmem:[%s2] sm:$0x1]
      %v66 = vld [vmem:[#allocation3] sm:$0xf]
      %v67 = vld [vmem:[#allocation6] sm:$0xf]
      %v68 = vld [vmem:[#allocation6 + $0x4] sm:$0xf]
      %v69 = vld [vmem:[#allocation6 + $0x8] sm:$0xf]
      %v70 = vld [vmem:[#allocation6 + $0xc] sm:$0xf]
      %v71 = vld [vmem:[#allocation6 + $0x10] sm:$0xf]
      %v72 = vld [vmem:[#allocation6 + $0x14] sm:$0xf]
      %v73 = vld [vmem:[#allocation6 + $0x18] sm:$0xf]
      %v74 = vld [vmem:[#allocation6 + $0x1c] sm:$0xf]
      %v75 = vld [vmem:[#allocation6 + $0x20] sm:$0xf]
      %v76 = vld [vmem:[#allocation6 + $0x24] sm:$0xf]
      %v77 = vld [vmem:[#allocation6 + $0x28] sm:$0xf]
      %v78 = vld [vmem:[#allocation6 + $0x2c] sm:$0xf]
      %v79 = vld [vmem:[#allocation6 + $0x30] sm:$0xf]
      %v80 = vld [vmem:[#allocation6 + $0x34] sm:$0xf]
      %v81 = vld [vmem:[#allocation6 + $0x38] sm:$0xf]
      %v82 = vld [vmem:[#allocation6 + $0x3c] sm:$0xf]
      %v99 = vunpack.c.l.b16 %v67
      %v100 = vunpack.c.l.b16 %v68
      %v101 = vunpack.c.l.b16 %v69
      %v102 = vunpack.c.l.b16 %v70
      %v103 = vunpack.c.l.b16 %v71
      %v104 = vunpack.c.l.b16 %v72
      %v105 = vunpack.c.l.b16 %v73
      %v106 = vunpack.c.l.b16 %v74
      %v107 = vunpack.c.l.b16 %v75
      %v108 = vunpack.c.l.b16 %v76
      %v109 = vunpack.c.l.b16 %v77
      %v110 = vunpack.c.l.b16 %v78
      %v111 = vunpack.c.l.b16 %v79
      %v112 = vunpack.c.l.b16 %v80
      %v113 = vunpack.c.l.b16 %v81
      %v114 = vunpack.c.l.b16 %v82
      %v115 = vpack.c.b16 %v100, %v99
      %v116 = vpack.c.b16 %v102, %v101
      %v117 = vpack.c.b16 %v104, %v103
      %v118 = vpack.c.b16 %v106, %v105
      %v119 = vpack.c.b16 %v108, %v107
      %v120 = vpack.c.b16 %v110, %v109
      %v121 = vpack.c.b16 %v112, %v111
      %v122 = vpack.c.b16 %v114, %v113
      %131 = vmatprep.subr.bf16.mxu0 0
      %132 = vmatpush1.bf16.msra.mxu0 %v115
      %133 = vmatprep.subr.bf16.mxu0 0
      %134 = vmatpush1.bf16.msra.mxu0 %v116
      %135 = vmatprep.subr.bf16.mxu0 0
      %136 = vmatpush1.bf16.msra.mxu0 %v117
      %137 = vmatprep.subr.bf16.mxu0 0
      %138 = vmatpush1.bf16.msra.mxu0 %v118
      %139 = vmatprep.subr.bf16.mxu0 0
      %140 = vmatpush1.bf16.msra.mxu0 %v119
      %141 = vmatprep.subr.bf16.mxu0 0
      %142 = vmatpush1.bf16.msra.mxu0 %v120
      %143 = vmatprep.subr.bf16.mxu0 0
      %144 = vmatpush1.bf16.msra.mxu0 %v121
      %145 = vmatprep.subr.bf16.mxu0 0
      %146 = vmatpush1.bf16.msra.mxu0 %v122
      %147 = vmatprep.subr.bf16.mxu0 0
      %148 = vmatpush1.bf16.msra.mxu0 0
      %149 = vmatprep.subr.bf16.mxu0 0
      %150 = vmatpush1.bf16.msra.mxu0 0
      %151 = vmatprep.subr.bf16.mxu0 0
      %152 = vmatpush1.bf16.msra.mxu0 0
      %153 = vmatprep.subr.bf16.mxu0 0
      %154 = vmatpush1.bf16.msra.mxu0 0
      %155 = vmatprep.subr.bf16.mxu0 0
      %156 = vmatpush1.bf16.msra.mxu0 0
      %157 = vmatprep.subr.bf16.mxu0 0
      %158 = vmatpush1.bf16.msra.mxu0 0
      %159 = vmatprep.subr.bf16.mxu0 0
      %160 = vmatpush1.bf16.msra.mxu0 0
      %161 = vmatprep.subr.bf16.mxu0 0
      %162 = vmatpush1.bf16.msra.mxu0 0
      %163 = vmatprep.mubr.bf16.mxu0 0
      %164 = vmatmul.mubr.bf16.gmra.mrb[0].mxu0 %v66
      %v165 = vpop.f32.mrb[0].mxu0
      %v166 = vadd.f32 0.0, %v165
      %v167 = vpop.f32.mrb[0].mxu0
      %v168 = vpop.f32.mrb[0].mxu0
      %v169 = vpop.f32.mrb[0].mxu0
      %170 = vdwg.mxu0
      %v172 = vlaneseq
      %v173 = vshrl.u32 %v172, 7
      %v174 = vsub.s32 0, %v173
      %v175 = vrot.slane %v65, %v174
      %v177 = vadd.f32 %v175, %v166
      %v178 = vmax.f32 %v177, 0.0
      %v179 = vpack.c.bf16 %v178, %v178
      %180 = vst [vmem:[#allocation2] sm:$0xf] %v179
    $region37: #{tpu_custom_call.1} parent=1 // pred_fallthru
      _
    %v181 = vld [vmem:[%s4] sm:$0x1]
    %v182 = vld [vmem:[#allocation2] sm:$0xf]
    %v183 = vld [vmem:[#allocation8] sm:$0xf]
    %v184 = vld [vmem:[#allocation8 + $0x4] sm:$0xf]
    %v185 = vld [vmem:[#allocation8 + $0x8] sm:$0xf]
    %v186 = vld [vmem:[#allocation8 + $0xc] sm:$0xf]
    %v187 = vld [vmem:[#allocation8 + $0x10] sm:$0xf]
    %v188 = vld [vmem:[#allocation8 + $0x14] sm:$0xf]
    %v189 = vld [vmem:[#allocation8 + $0x18] sm:$0xf]
    %v190 = vld [vmem:[#allocation8 + $0x1c] sm:$0xf]
    %v191 = vld [vmem:[#allocation8 + $0x20] sm:$0xf]
    %v192 = vld [vmem:[#allocation8 + $0x24] sm:$0xf]
    %v193 = vld [vmem:[#allocation8 + $0x28] sm:$0xf]
    %v194 = vld [vmem:[#allocation8 + $0x2c] sm:$0xf]
    %v195 = vld [vmem:[#allocation8 + $0x30] sm:$0xf]
    %v196 = vld [vmem:[#allocation8 + $0x34] sm:$0xf]
    %v197 = vld [vmem:[#allocation8 + $0x38] sm:$0xf]
    %v198 = vld [vmem:[#allocation8 + $0x3c] sm:$0xf]
    %v215 = vunpack.c.l.b16 %v183
    %v216 = vunpack.c.l.b16 %v184
    %v217 = vunpack.c.l.b16 %v185
    %v218 = vunpack.c.l.b16 %v186
    %v219 = vunpack.c.l.b16 %v187
    %v220 = vunpack.c.l.b16 %v188
    %v221 = vunpack.c.l.b16 %v189
    %v222 = vunpack.c.l.b16 %v190
    %v223 = vunpack.c.l.b16 %v191
    %v224 = vunpack.c.l.b16 %v192
    %v225 = vunpack.c.l.b16 %v193
    %v226 = vunpack.c.l.b16 %v194
    %v227 = vunpack.c.l.b16 %v195
    %v228 = vunpack.c.l.b16 %v196
    %v229 = vunpack.c.l.b16 %v197
    %v230 = vunpack.c.l.b16 %v198
    %v231 = vpack.c.b16 %v216, %v215
    %v232 = vpack.c.b16 %v218, %v217
    %v233 = vpack.c.b16 %v220, %v219
    %v234 = vpack.c.b16 %v222, %v221
    %v235 = vpack.c.b16 %v224, %v223
    %v236 = vpack.c.b16 %v226, %v225
    %v237 = vpack.c.b16 %v228, %v227
    %v238 = vpack.c.b16 %v230, %v229
    %247 = vmatprep.subr.bf16.mxu0 0
    %248 = vmatpush1.bf16.msra.mxu0 %v231
    %249 = vmatprep.subr.bf16.mxu0 0
    %250 = vmatpush1.bf16.msra.mxu0 %v232
    %251 = vmatprep.subr.bf16.mxu0 0
    %252 = vmatpush1.bf16.msra.mxu0 %v233
    %253 = vmatprep.subr.bf16.mxu0 0
    %254 = vmatpush1.bf16.msra.mxu0 %v234
    %255 = vmatprep.subr.bf16.mxu0 0
    %256 = vmatpush1.bf16.msra.mxu0 %v235
    %257 = vmatprep.subr.bf16.mxu0 0
    %258 = vmatpush1.bf16.msra.mxu0 %v236
    %259 = vmatprep.subr.bf16.mxu0 0
    %260 = vmatpush1.bf16.msra.mxu0 %v237
    %261 = vmatprep.subr.bf16.mxu0 0
    %262 = vmatpush1.bf16.msra.mxu0 %v238
    %263 = vmatprep.subr.bf16.mxu0 0
    %264 = vmatpush1.bf16.msra.mxu0 0
    %265 = vmatprep.subr.bf16.mxu0 0
    %266 = vmatpush1.bf16.msra.mxu0 0
    %267 = vmatprep.subr.bf16.mxu0 0
    %268 = vmatpush1.bf16.msra.mxu0 0
    %269 = vmatprep.subr.bf16.mxu0 0
    %270 = vmatpush1.bf16.msra.mxu0 0
    %271 = vmatprep.subr.bf16.mxu0 0
    %272 = vmatpush1.bf16.msra.mxu0 0
    %273 = vmatprep.subr.bf16.mxu0 0
    %274 = vmatpush1.bf16.msra.mxu0 0
    %275 = vmatprep.subr.bf16.mxu0 0
    %276 = vmatpush1.bf16.msra.mxu0 0
    %277 = vmatprep.subr.bf16.mxu0 0
    %278 = vmatpush1.bf16.msra.mxu0 0
    %279 = vmatprep.mubr.bf16.mxu0 0
    %280 = vmatmul.mubr.bf16.gmra.mrb[0].mxu0 %v182
    %v281 = vpop.f32.mrb[0].mxu0
    %v282 = vadd.f32 0.0, %v281
    %v283 = vpop.f32.mrb[0].mxu0
    %v284 = vpop.f32.mrb[0].mxu0
    %v285 = vpop.f32.mrb[0].mxu0
    %286 = vdwg.mxu0
    %v288 = vlaneseq
    %v289 = vshrl.u32 %v288, 7
    %v290 = vsub.s32 0, %v289
    %v291 = vrot.slane %v181, %v290
    %v293 = vadd.f32 %v291, %v282
    %294 = vst [vmem:[#allocation9] sm:$0xff] %v293
    // Predicated region
    $region38: #{tpu_custom_call.1} parent=1 // pred_check
      _
    $region39: #{tpu_custom_call.1} parent=1 // pred_check_branch
      %296 = sbr.rel (0) target = $region41
    $region40: #{tpu_custom_call.1} parent=1 // pred_region
      %s298 = ssub.s32 128, 128
      %299 = vsyncadd [#allocation5], %s298
      %s301 = sshll.u32 [#allocation9], 4
      %s302 = int_to_ptr.vmem [resolvable:$true] %s301
      %304 = dma.vmem_to_hbm [thread:$0]  %s302, 128, %s5, [#allocation5]
    $region41: #{tpu_custom_call.1} parent=1 // pred_fallthru
      _
    // Predicated region
    $region42: #{tpu_custom_call.1} parent=1 // pred_check
      _
    $region43: #{tpu_custom_call.1} parent=1 // pred_check_branch
      %306 = sbr.rel (0) target = $region45
    $region44: #{tpu_custom_call.1} parent=1 // pred_region
      %307 = dma.done [#allocation5], 128
    $region45: #{tpu_custom_call.1} parent=1 // pred_fallthru
      _
    %308 = vsyncpa [#allocation4], 1
    %309 = vsyncpa [#allocation7], 1
    %310 = vsyncpa [#allocation5], 1

</llo_original>
